<compile_context>
chip_gen: v7x
topology: tpu7x:2x2x1
jax: 0.10.0
libtpu: 0.0.40
codegen_flags: <defaults>
</compile_context>

<pallas_src>
import jax
import jax.numpy as jnp
from jax.experimental import pallas as pl
from jax.experimental.pallas import tpu as pltpu


def _blur_kernel(x_ref, o_ref):
    # x_ref: (tile_nc, H+2, W+2) zero-padded input planes
    # o_ref: (tile_nc, H,   W)
    _, hh, ww = o_ref.shape
    x = x_ref[...].astype(jnp.float32)
    # vertical [1, 2, 1] pass (sublane-offset slices)
    t = x[:, 0:hh, :] + 2.0 * x[:, 1:hh + 1, :] + x[:, 2:hh + 2, :]
    # horizontal [1, 2, 1] pass (lane-offset slices) + 1/16 normalization
    y = t[:, :, 0:ww] + 2.0 * t[:, :, 1:ww + 1] + t[:, :, 2:ww + 2]
    o_ref[...] = (y * (1.0 / 16.0)).astype(o_ref.dtype)


def blur(x_nchw, *, tile_nc=None):
    """Forward pass of Blur: depthwise 3x3 binomial blur, padding=1, stride=1.

    x_nchw: (N, C, H, W) -> (N, C, H, W)
    """
    n, c, h, w = x_nchw.shape
    nc = n * c
    x = x_nchw.reshape(nc, h, w)

    # Target ~2 MiB input blocks: big enough to amortize the ~0.35us/step
    # overhead, small enough that double-buffered in+out blocks stay far below
    # v7x's 64 MiB physical VMEM (raise the target / limit on v6e's 128 MiB).
    plane_bytes = (h + 2) * (w + 2) * x.dtype.itemsize
    if tile_nc is None:
        tile_nc = max(1, min(nc, (2 << 20) // max(plane_bytes, 1)))
    num_tiles = (nc + tile_nc - 1) // tile_nc
    nc_pad = num_tiles * tile_nc

    # Single glue materialization in HBM: round up the channel axis and add the
    # 1-pixel spatial halo (zeros) so every in-kernel access is a static slice.
    xp = jnp.pad(x, ((0, nc_pad - nc), (1, 1), (1, 1)))

    out = pl.pallas_call(
        _blur_kernel,
        out_shape=jax.ShapeDtypeStruct((nc_pad, h, w), x.dtype),
        grid=(num_tiles,),
        in_specs=[pl.BlockSpec((tile_nc, h + 2, w + 2), lambda i: (i, 0, 0))],
        out_specs=pl.BlockSpec((tile_nc, h, w), lambda i: (i, 0, 0)),
        compiler_params=pltpu.CompilerParams(
            dimension_semantics=("parallel",),
            vmem_limit_bytes=32 * 1024 * 1024),
    )(xp)

    return out[:nc].reshape(n, c, h, w)


if __name__ == "__main__":
    key = jax.random.PRNGKey(0)
    batch, channel, spatial = 2, 4, 16
    x = jax.random.normal(key, (batch, channel, spatial, spatial), jnp.float32)

    # tile_nc=3 exercises multiple grid steps AND the channel-padding path.
    out = blur(x, tile_nc=3)
    out = jax.block_until_ready(out)

    # Reference: exactly what Blur.forward computes (same fixed depthwise
    # kernel for every channel, padding=1, stride=1), in exact f32.
    w2d = jnp.array([[1., 2., 1.], [2., 4., 2.], [1., 2., 1.]], jnp.float32)
    w2d = w2d / w2d.sum()
    xp = jnp.pad(x, ((0, 0), (0, 0), (1, 1), (1, 1)))
    ref = sum(w2d[dh, dw] * xp[:, :, dh:dh + spatial, dw:dw + spatial]
              for dh in range(3) for dw in range(3))

    assert out.shape == ref.shape, (out.shape, ref.shape)
    max_err = float(jnp.max(jnp.abs(out - ref)))
    assert jnp.allclose(out, ref, atol=1e-4, rtol=1e-4), max_err
    print("KERNEL_OK")
</pallas_src>

<mosaic_0001>
module attributes {stable_mosaic.version = 11 : i64} {
  func.func @_blur_kernel(%arg0: i32, %arg1: memref<3x18x18xf32, #tpu.memory_space<vmem>>, %arg2: memref<3x16x16xf32, #tpu.memory_space<vmem>>) attributes {dimension_semantics = [#tpu.dimension_semantics<parallel>], iteration_bounds = array<i64: 3>, scalar_prefetch = 0 : i64, scratch_operands = 0 : i64, tpu.core_type = #tpu.core_type<tc>, window_params = [{transform_indices = @transform_0, window_bounds = array<i64: 3, 18, 18>}, {transform_indices = @transform_1, window_bounds = array<i64: 3, 16, 16>}]} {
    %c0 = arith.constant 0 : index
    %c0_0 = arith.constant 0 : index
    %c0_1 = arith.constant 0 : index
    %0 = vector.load %arg1[%c0, %c0_0, %c0_1] : memref<3x18x18xf32, #tpu.memory_space<vmem>>, vector<3x18x18xf32>
    %1 = vector.extract_strided_slice %0 {offsets = [0, 0, 0], sizes = [3, 16, 18], strides = [1, 1, 1]} : vector<3x18x18xf32> to vector<3x16x18xf32>
    %2 = vector.extract_strided_slice %0 {offsets = [0, 1, 0], sizes = [3, 16, 18], strides = [1, 1, 1]} : vector<3x18x18xf32> to vector<3x16x18xf32>
    %cst = arith.constant 2.000000e+00 : f32
    %3 = vector.broadcast %cst : f32 to vector<3x16x18xf32>
    %4 = arith.mulf %3, %2 : vector<3x16x18xf32>
    %5 = arith.addf %1, %4 : vector<3x16x18xf32>
    %6 = vector.extract_strided_slice %0 {offsets = [0, 2, 0], sizes = [3, 16, 18], strides = [1, 1, 1]} : vector<3x18x18xf32> to vector<3x16x18xf32>
    %7 = arith.addf %5, %6 : vector<3x16x18xf32>
    %8 = vector.extract_strided_slice %7 {offsets = [0, 0, 0], sizes = [3, 16, 16], strides = [1, 1, 1]} : vector<3x16x18xf32> to vector<3x16x16xf32>
    %9 = vector.extract_strided_slice %7 {offsets = [0, 0, 1], sizes = [3, 16, 16], strides = [1, 1, 1]} : vector<3x16x18xf32> to vector<3x16x16xf32>
    %cst_2 = arith.constant 2.000000e+00 : f32
    %10 = vector.broadcast %cst_2 : f32 to vector<3x16x16xf32>
    %11 = arith.mulf %10, %9 : vector<3x16x16xf32>
    %12 = arith.addf %8, %11 : vector<3x16x16xf32>
    %13 = vector.extract_strided_slice %7 {offsets = [0, 0, 2], sizes = [3, 16, 16], strides = [1, 1, 1]} : vector<3x16x18xf32> to vector<3x16x16xf32>
    %14 = arith.addf %12, %13 : vector<3x16x16xf32>
    %cst_3 = arith.constant 6.250000e-02 : f32
    %15 = vector.broadcast %cst_3 : f32 to vector<3x16x16xf32>
    %16 = arith.mulf %14, %15 : vector<3x16x16xf32>
    %c0_4 = arith.constant 0 : index
    %c0_5 = arith.constant 0 : index
    %c0_6 = arith.constant 0 : index
    %17 = vector.load %arg2[%c0_4, %c0_5, %c0_6] : memref<3x16x16xf32, #tpu.memory_space<vmem>>, vector<3x16x16xf32>
    tpu.vector_store %arg2[%c0_4, %c0_5, %c0_6], %16 {strides = array<i32>} : memref<3x16x16xf32, #tpu.memory_space<vmem>>, vector<3x16x16xf32>,
    return
  }
  func.func @transform_0(%arg0: i32) -> (i32, i32, i32) {
    %c0_i32 = arith.constant 0 : i32
    %c0_i32_0 = arith.constant 0 : i32
    %c0_i32_1 = arith.constant 0 : i32
    return %arg0, %c0_i32, %c0_i32_0 : i32, i32, i32
  }
  func.func @transform_1(%arg0: i32) -> (i32, i32, i32) {
    %c0_i32 = arith.constant 0 : i32
    %c0_i32_0 = arith.constant 0 : i32
    %c0_i32_1 = arith.constant 0 : i32
    return %arg0, %c0_i32, %c0_i32_0 : i32, i32, i32
  }
}

</mosaic_0001>

<llo_original>
// kernel: tpu_custom_call.1
$region0: #{tpu_custom_call.1}
  #allocation0 [shape = 'u32[]', space=smem, size = 0x4, offset = 0x4, fixed_abs, tag = 'smem constant byte address 0x4 - core index']
  #allocation1 [shape = 'u32[144,128]{1,0:T(1,128)}', space=vmem, size = 0x12000, scoped, tag = 'internal scratch']
  %s0 = inlined_call_operand.hbm [shape: f32[9,18,18], index: 0, kind: input, shape index: {}]
  %s1 = inlined_call_operand.hbm [shape: f32[9,16,16], index: 1, kind: output, shape index: {}]
  %s2 = sld [smem:[#allocation0]]
  $region41: #{tpu_custom_call.1} parent=0
    _
  %s4 = ssub.s32 1, %s2
  %s5 = scalar_select 0, %s4, %s2
  $region1: #{tpu_custom_call.1} parent=0
    #allocation2 [shape = 'u8[73728]{0}', space=vmem, size = 0x12000, scoped, tag = 'input window, operand 0']
    #allocation3 [shape = 's32[2]{0}', space=sflag, size = 0x8, scoped, tag = 'scoped memory for tpu_custom_call.1']
    #allocation4 [shape = 's32[2]{0}', space=sflag, size = 0x8, scoped, tag = 'scoped memory for tpu_custom_call.1']
    #allocation5 [shape = 'u8[49152]{0}', space=vmem, size = 0xc000, scoped, tag = 'output window, operand 0']
    %6 = vsyncpa [#allocation3], 0
    %s7 = scalar_lea.sflag [#allocation3], 1
    %8 = vsyncpa %s7, 0
    %9 = vsyncpa [#allocation4], 0
    %s10 = scalar_lea.sflag [#allocation4], 1
    %11 = vsyncpa %s10, 0
    loop: start=0, step=1, limit=5
    $region2: #{tpu_custom_call.1} parent=1 // loop_pre_header
      _
    $region3: #{tpu_custom_call.1} parent=1 // loop_header
      %s13 = sphi 0, %s17
      %p14 = scmp.ge.s32.totalorder %s13, 5
      %s23 = sphi 0, %s25
      %s26 = sphi 0, %s23
      %s27 = sphi 0, %s26
      %s43 = sphi 0, %s27
      %s49 = sphi 0, %s51
      %s52 = sphi 0, %s49
      %s53 = sphi 0, %s52
      %s69 = sphi 0, %s53
    $region4: #{tpu_custom_call.1} parent=1 // loop_header_branch
      %16 = sbr.rel (%p14) target = $region8
    $region5: #{tpu_custom_call.1} parent=1 // loop_body
      %s18 = ssub.s32 %s13, 1
      %s19 = ssub.s32 %s13, 2
      %s20 = sadd.s32 %s13, 1
      %s21 = ssub.s32 %s13, %s20
      %p22 = scmp.eq.s32.totalorder %s21, 0
      %s24 = sadd.s32 %s23, 1
      %s25 = scalar_select %p22, %s23, %s24
      %p28 = pneg %p22
      %p29 = scmp.eq.s32.totalorder %s13, 2
      %p30 = por %p28, %p29
      %p31 = scmp.ne.s32.totalorder %s23, %s26
      %p32 = scmp.eq.s32.totalorder %s13, 0
      %p33 = por %p31, %p32
      %p34 = scmp.ne.s32.totalorder %s23, %s26
      %p35 = scmp.eq.s32.totalorder %s18, 2
      %p36 = por %p34, %p35
      %p37 = scmp.ne.s32.totalorder %s26, %s27
      %p38 = scmp.eq.s32.totalorder %s18, 0
      %p39 = por %p37, %p38
      %p40 = scmp.ne.s32.totalorder %s26, %s27
      %p41 = scmp.eq.s32.totalorder %s19, 2
      %p42 = por %p40, %p41
      %p44 = scmp.ne.s32.totalorder %s27, %s43
      %p45 = scmp.eq.s32.totalorder %s19, 0
      %p46 = por %p44, %p45
      %s47 = ssub.s32 %s13, %s20
      %p48 = scmp.eq.s32.totalorder %s47, 0
      %s50 = sadd.s32 %s49, 1
      %s51 = scalar_select %p48, %s49, %s50
      %p54 = pneg %p48
      %p55 = scmp.eq.s32.totalorder %s13, 2
      %p56 = por %p54, %p55
      %p57 = scmp.ne.s32.totalorder %s49, %s52
      %p58 = scmp.eq.s32.totalorder %s13, 0
      %p59 = por %p57, %p58
      %p60 = scmp.ne.s32.totalorder %s49, %s52
      %p61 = scmp.eq.s32.totalorder %s18, 2
      %p62 = por %p60, %p61
      %p63 = scmp.ne.s32.totalorder %s52, %s53
      %p64 = scmp.eq.s32.totalorder %s18, 0
      %p65 = por %p63, %p64
      %p66 = scmp.ne.s32.totalorder %s52, %s53
      %p67 = scmp.eq.s32.totalorder %s19, 2
      %p68 = por %p66, %p67
      %p70 = scmp.ne.s32.totalorder %s53, %s69
      %p71 = scmp.eq.s32.totalorder %s19, 0
      %p72 = por %p70, %p71
      %p73 = scmp.le.s32.totalorder 1, %s13
      %p74 = scmp.lt.s32.totalorder %s13, 4
      %p75 = pnand %p73, %p74
      %p76 = pneg %p75
      // Predicated region
      $region9: #{tpu_custom_call.1} parent=5 // pred_check
        _
      $region10: #{tpu_custom_call.1} parent=5 // pred_check_branch
        %78 = sbr.rel (%p75) target = $region12
      $region11: #{tpu_custom_call.1} parent=5 // pred_region
        %s79 = ssub.s32 %s13, 1
      $region12: #{tpu_custom_call.1} parent=5 // pred_fallthru
        _
      %p80 = scmp.lt.s32.totalorder %s13, 3
      // Predicated region
      $region13: #{tpu_custom_call.1} parent=5 // pred_check
        %p81 = pneg %p80
      $region14: #{tpu_custom_call.1} parent=5 // pred_check_branch
        %83 = sbr.rel (%p81) target = $region16
      $region15: #{tpu_custom_call.1} parent=5 // pred_region
        // Predicated region
        $region17: #{tpu_custom_call.1} parent=15 // pred_check
          %p84 = pneg %p33
        $region18: #{tpu_custom_call.1} parent=15 // pred_check_branch
          %86 = sbr.rel (%p84) target = $region20
        $region19: #{tpu_custom_call.1} parent=15 // pred_region
          %s87 = sand.u32 %s23, 1
          %s88 = scalar_lea.sflag [#allocation3], %s87
          %s89 = sand.u32 %s23, 1
          %s90 = smul.addr %s89, 72
          %s91 = scalar_lea.vmem [#allocation2], %s90
          %s92 = smul.u32 3, %s13
          %s94 = ssub.s32 1152, 1152
          %95 = vsyncadd %s88, %s94
          %s96 = smul.addr %s92, 3
          %s97 = smul.addr %s96, 128
          %s98 = scalar_lea.hbm %s0, %s97
          %s99 = sshll.u32 %s91, 4
          %s100 = int_to_ptr.vmem [resolvable:$true] %s99
          %105 = dma.hbm_to_vmem [thread:$0]  %s98, 1152, %s100, %s88, 128, 128, 8
        $region20: #{tpu_custom_call.1} parent=15 // pred_fallthru
          _
      $region16: #{tpu_custom_call.1} parent=5 // pred_fallthru
        _
      %p106 = scmp.le.s32.totalorder 1, %s13
      %p107 = scmp.lt.s32.totalorder %s13, 4
      %p108 = pnand %p106, %p107
      %p109 = pneg %p108
      // Predicated region
      $region21: #{tpu_custom_call.1} parent=5 // pred_check
        _
      $region22: #{tpu_custom_call.1} parent=5 // pred_check_branch
        %111 = sbr.rel (%p108) target = $region24
      $region23: #{tpu_custom_call.1} parent=5 // pred_region
        %s112 = ssub.s32 %s13, 1
        %s113 = sand.u32 %s26, 1
        %s114 = scalar_lea.sflag [#allocation3], %s113
        %s115 = sand.u32 %s26, 1
        %s116 = smul.addr %s115, 72
        %s117 = scalar_lea.vmem [#allocation2], %s116
        // Predicated region
        $region25: #{tpu_custom_call.1} parent=23 // pred_check
          %p118 = pneg %p39
        $region26: #{tpu_custom_call.1} parent=23 // pred_check_branch
          %120 = sbr.rel (%p118) target = $region28
        $region27: #{tpu_custom_call.1} parent=23 // pred_region
          %121 = dma.done %s114, 1152
        $region28: #{tpu_custom_call.1} parent=23 // pred_fallthru
          _
        %s122 = sand.u32 %s26, 1
        %s123 = scalar_lea.sflag [#allocation3], %s122
        %s124 = sand.u32 %s26, 1
        %s125 = smul.addr %s124, 72
        %s126 = scalar_lea.vmem [#allocation2], %s125
        %p127 = pneg %p39
        %p128 = pneg %p36
        %p129 = pneg %p65
        %p130 = pneg %p62
        %s131 = sand.u32 %s52, 1
        %s132 = scalar_lea.sflag [#allocation4], %s131
        %s133 = sand.u32 %s52, 1
        %s134 = smul.addr %s133, 48
        %s135 = scalar_lea.vmem [#allocation5], %s134
        %s136 = smul.u32 3, %s18
        %s137 = smul.u32 3, %s18
        %v138 = vld [vmem:[%s117] sm:$0xff]
        %v139 = vld [vmem:[%s117 + $0x8] sm:$0xff]
        %v140 = vld [vmem:[%s117 + $0x10] sm:$0x3]
        %v141 = vld [vmem:[%s117 + $0x18] sm:$0xff]
        %v142 = vld [vmem:[%s117 + $0x20] sm:$0xff]
        %v143 = vld [vmem:[%s117 + $0x28] sm:$0x3]
        %v144 = vld [vmem:[%s117 + $0x30] sm:$0xff]
        %v145 = vld [vmem:[%s117 + $0x38] sm:$0xff]
        %v146 = vld [vmem:[%s117 + $0x40] sm:$0x3]
        %v147 = vmul.f32 %v138, 2.0
        %v148 = vmul.f32 %v139, 2.0
        %v149 = vmul.f32 %v140, 2.0
        %v150 = vmul.f32 %v141, 2.0
        %v151 = vmul.f32 %v142, 2.0
        %v152 = vmul.f32 %v143, 2.0
        %v153 = vmul.f32 %v144, 2.0
        %v154 = vmul.f32 %v145, 2.0
        %v155 = vmul.f32 %v146, 2.0
        %vm165 = vcmask 1046528
        %v166 = vrot.slane %v147, 1
        %v167 = vrot.slane %v148, 1
        %v168 = vsel %vm165, %v166, %v167
        %v169 = vrot.slane %v149, 1
        %v170 = vsel %vm165, %v167, %v169
        %v171 = vrot.slane %v150, 1
        %v172 = vrot.slane %v151, 1
        %v173 = vsel %vm165, %v171, %v172
        %v174 = vrot.slane %v152, 1
        %v175 = vsel %vm165, %v172, %v174
        %v176 = vrot.slane %v153, 1
        %v177 = vrot.slane %v154, 1
        %v178 = vsel %vm165, %v176, %v177
        %v179 = vrot.slane %v155, 1
        %v180 = vsel %vm165, %v177, %v179
        %v187 = vadd.f32 %v138, %v168
        %v188 = vadd.f32 %v139, %v170
        %v189 = vadd.f32 %v141, %v173
        %v190 = vadd.f32 %v142, %v175
        %v191 = vadd.f32 %v144, %v178
        %v192 = vadd.f32 %v145, %v180
        %vm202 = vcmask 1045504
        %v203 = vrot.slane %v138, 2
        %v204 = vrot.slane %v139, 2
        %v205 = vsel %vm202, %v203, %v204
        %v206 = vrot.slane %v140, 2
        %v207 = vsel %vm202, %v204, %v206
        %v208 = vrot.slane %v141, 2
        %v209 = vrot.slane %v142, 2
        %v210 = vsel %vm202, %v208, %v209
        %v211 = vrot.slane %v143, 2
        %v212 = vsel %vm202, %v209, %v211
        %v213 = vrot.slane %v144, 2
        %v214 = vrot.slane %v145, 2
        %v215 = vsel %vm202, %v213, %v214
        %v216 = vrot.slane %v146, 2
        %v217 = vsel %vm202, %v214, %v216
        %v224 = vadd.f32 %v187, %v205
        %v225 = vadd.f32 %v188, %v207
        %v226 = vadd.f32 %v189, %v210
        %v227 = vadd.f32 %v190, %v212
        %v228 = vadd.f32 %v191, %v215
        %v229 = vadd.f32 %v192, %v217
        %v230 = vmul.f32 %v224, 2.0
        %v231 = vmul.f32 %v225, 2.0
        %v232 = vmul.f32 %v226, 2.0
        %v233 = vmul.f32 %v227, 2.0
        %v234 = vmul.f32 %v228, 2.0
        %v235 = vmul.f32 %v229, 2.0
        %242 = vrot.lane.b32.xlu0 %v230, 127
        %v243 = vpop.permute.xlu0 %242
        %244 = vrot.lane.b32.xlu0 %v231, 127
        %v245 = vpop.permute.xlu0 %244
        %246 = vrot.lane.b32.xlu0 %v232, 127
        %v247 = vpop.permute.xlu0 %246
        %248 = vrot.lane.b32.xlu0 %v233, 127
        %v249 = vpop.permute.xlu0 %248
        %250 = vrot.lane.b32.xlu0 %v234, 127
        %v251 = vpop.permute.xlu0 %250
        %252 = vrot.lane.b32.xlu0 %v235, 127
        %v253 = vpop.permute.xlu0 %252
        %v260 = vadd.f32 %v224, %v243
        %v261 = vadd.f32 %v225, %v245
        %v262 = vadd.f32 %v226, %v247
        %v263 = vadd.f32 %v227, %v249
        %v264 = vadd.f32 %v228, %v251
        %v265 = vadd.f32 %v229, %v253
        %272 = vrot.lane.b32.xlu0 %v224, 126
        %v273 = vpop.permute.xlu0 %272
        %274 = vrot.lane.b32.xlu0 %v225, 126
        %v275 = vpop.permute.xlu0 %274
        %276 = vrot.lane.b32.xlu0 %v226, 126
        %v277 = vpop.permute.xlu0 %276
        %278 = vrot.lane.b32.xlu0 %v227, 126
        %v279 = vpop.permute.xlu0 %278
        %280 = vrot.lane.b32.xlu0 %v228, 126
        %v281 = vpop.permute.xlu0 %280
        %282 = vrot.lane.b32.xlu0 %v229, 126
        %v283 = vpop.permute.xlu0 %282
        %v290 = vadd.f32 %v260, %v273
        %v291 = vadd.f32 %v261, %v275
        %v292 = vadd.f32 %v262, %v277
        %v293 = vadd.f32 %v263, %v279
        %v294 = vadd.f32 %v264, %v281
        %v295 = vadd.f32 %v265, %v283
        %v296 = vmul.f32 %v290, 0.0625
        %v297 = vmul.f32 %v291, 0.0625
        %v298 = vmul.f32 %v292, 0.0625
        %v299 = vmul.f32 %v293, 0.0625
        %v300 = vmul.f32 %v294, 0.0625
        %v301 = vmul.f32 %v295, 0.0625
        %vm302 = vcmask 130048
        %303 = vst.msk [vmem:[%s135] sm:$0xff] %vm302, %v296
        %304 = vst.msk [vmem:[%s135 + $0x8] sm:$0xff] %vm302, %v297
        %305 = vst.msk [vmem:[%s135 + $0x10] sm:$0xff] %vm302, %v298
        %306 = vst.msk [vmem:[%s135 + $0x18] sm:$0xff] %vm302, %v299
        %307 = vst.msk [vmem:[%s135 + $0x20] sm:$0xff] %vm302, %v300
        %308 = vst.msk [vmem:[%s135 + $0x28] sm:$0xff] %vm302, %v301
        %s309 = sand.u32 %s52, 1
        %s310 = scalar_lea.sflag [#allocation4], %s309
        %s311 = sand.u32 %s52, 1
        %s312 = smul.addr %s311, 48
        %s313 = scalar_lea.vmem [#allocation5], %s312
        // Predicated region
        $region29: #{tpu_custom_call.1} parent=23 // pred_check
          %p314 = pneg %p62
        $region30: #{tpu_custom_call.1} parent=23 // pred_check_branch
          %316 = sbr.rel (%p314) target = $region32
        $region31: #{tpu_custom_call.1} parent=23 // pred_region
          %s317 = smul.u32 3, %s18
          %s319 = ssub.s32 768, 768
          %320 = vsyncadd %s310, %s319
          %s321 = smul.addr %s317, 2
          %s322 = smul.addr %s321, 128
          %s323 = scalar_lea.hbm %s1, %s322
          %s324 = sshll.u32 %s313, 4
          %s325 = int_to_ptr.vmem [resolvable:$true] %s324
          %330 = dma.vmem_to_hbm [thread:$0]  %s325, 768, %s323, %s310, 128, 128, 8
        $region32: #{tpu_custom_call.1} parent=23 // pred_fallthru
          _
      $region24: #{tpu_custom_call.1} parent=5 // pred_fallthru
        _
      %p331 = scmp.le.s32.totalorder 2, %s13
      // Predicated region
      $region33: #{tpu_custom_call.1} parent=5 // pred_check
        %p332 = pneg %p331
      $region34: #{tpu_custom_call.1} parent=5 // pred_check_branch
        %334 = sbr.rel (%p332) target = $region36
      $region35: #{tpu_custom_call.1} parent=5 // pred_region
        %s335 = ssub.s32 %s13, 2
        // Predicated region
        $region37: #{tpu_custom_call.1} parent=35 // pred_check
          %p336 = pneg %p68
        $region38: #{tpu_custom_call.1} parent=35 // pred_check_branch
          %338 = sbr.rel (%p336) target = $region40
        $region39: #{tpu_custom_call.1} parent=35 // pred_region
          %s339 = sand.u32 %s53, 1
          %s340 = scalar_lea.sflag [#allocation4], %s339
          %s341 = sand.u32 %s53, 1
          %s342 = smul.addr %s341, 48
          %s343 = scalar_lea.vmem [#allocation5], %s342
          %344 = dma.done %s340, 768
        $region40: #{tpu_custom_call.1} parent=35 // pred_fallthru
          _
      $region36: #{tpu_custom_call.1} parent=5 // pred_fallthru
        _
    $region6: #{tpu_custom_call.1} parent=1 // loop_footer
      %s17 = sadd.s32 1, %s13
    $region7: #{tpu_custom_call.1} parent=1 // loop_footer_branch
      %12 = sbr.rel target = $region3
    $region8: #{tpu_custom_call.1} parent=1 // loop_exit
      _
    %345 = vsyncpa [#allocation3], 1
    %s346 = scalar_lea.sflag [#allocation3], 1
    %347 = vsyncpa %s346, 1
    %348 = vsyncpa [#allocation4], 1
    %s349 = scalar_lea.sflag [#allocation4], 1
    %350 = vsyncpa %s349, 1

</llo_original>
